<compile_context>
chip_gen: v5e
topology: v5e:2x2
jax: 0.10.0
libtpu: 0.0.40
codegen_flags: <defaults>
</compile_context>

<pallas_src>
import functools
import math

import numpy as np
import jax
import jax.numpy as jnp
from jax.experimental import pallas as pl
from jax.experimental.pallas import tpu as pltpu


def build_pe(d_model: int, max_len: int = 5000, dtype=jnp.float32) -> jnp.ndarray:
    """Reference positional-encoding buffer, identical to the torch __init__
    (used only for the correctness check; the kernel recomputes pe on the fly)."""
    position = jnp.arange(0, max_len, dtype=jnp.float32)[:, None]              # (max_len, 1)
    div_term = jnp.exp(jnp.arange(0, d_model, 2, dtype=jnp.float32)
                       * (-math.log(10000.0) / d_model))                        # (d_model/2,)
    angles = position * div_term                                                # (max_len, d_model/2)
    pe = jnp.zeros((max_len, d_model), dtype=jnp.float32)
    pe = pe.at[:, 0::2].set(jnp.sin(angles))
    pe = pe.at[:, 1::2].set(jnp.cos(angles))
    return pe[None, :, :].astype(dtype)                                         # (1, max_len, d_model)


def _fold_factor(S: int, D: int) -> int:
    """How many consecutive positions to fold into one lane-dense row.
    Row width becomes fold*D; we want a multiple of 128 so stores are unmasked.
    If folding is impossible (fold doesn't divide S), fall back to fold=1."""
    if D % 128 == 0:
        return 1
    f = 128 // math.gcd(D, 128)
    return f if S % f == 0 else 1


def _vmem_budget():
    """(target block bytes, vmem_limit_bytes), generation-aware."""
    try:
        cap = pltpu.get_tpu_info().vmem_capacity_bytes
    except Exception:  # pragma: no cover - info query can fail off-TPU / older jax
        cap = None
    if cap is not None and cap > 64 * 1024 * 1024:
        # v5e / v6e: 128 MiB physical VMEM -> big blocks amortize the ~0.35us/step
        # fixed grid overhead (85%+ of HBM roofline at 512+-row tiles).
        return 8 * 1024 * 1024, 64 * 1024 * 1024
    # v7x-class (64 MiB / TC) or unknown chip: stay conservative.
    # in+out double-buffered = 4x block, plus the pe scratch (1x block).
    return 4 * 1024 * 1024, 40 * 1024 * 1024


def _row_tile(R: int, LW: int, itemsize: int, target_bytes: int) -> int:
    """Row tile: multiple of 8, ~target_bytes per block.  Need NOT divide R --
    the grid uses pl.cdiv and Pallas masks the ragged tail block."""
    if R <= 8:
        return R  # block dim == full array dim is always legal
    target_rows = max(8, target_bytes // max(1, LW * itemsize))
    tr = min(target_rows, R)
    return max(8, (tr // 8) * 8)


@functools.lru_cache(maxsize=None)
def _pe_constants(d_model: int, fold: int) -> jnp.ndarray:
    """(2, fold*d_model) f32 per-lane constants:
       row 0 = freq * fold                        (angle slope per x3 row)
       row 1 = pos_offset * freq + phase          (angle at row 0)
    with phase = pi/2 on odd features so cos becomes a single sin."""
    D, TS = d_model, fold
    LW = TS * D
    lane = np.arange(LW)
    feat = lane % D
    posoff = (lane // D).astype(np.float32)
    div_term = np.exp(np.arange(0, D, 2, dtype=np.float32) * (-math.log(10000.0) / D))
    freq = div_term[feat // 2].astype(np.float32)
    phase = np.where(feat % 2 == 0, 0.0, 0.5 * math.pi).astype(np.float32)
    const = np.stack([freq * np.float32(TS), posoff * freq + phase], axis=0)   # (2, LW)
    return jnp.asarray(const)


def _pe_add_kernel(x_ref, const_ref, o_ref, pe_ref, *, rows_per_block: int):
    """x_ref / o_ref : (TR, LW) lane-dense tile (LW = fold * d_model)
       const_ref     : (2, LW)  [freq*fold ; posoff*freq + phase]
       pe_ref        : (TR, LW) VMEM scratch caching pe for this row-tile."""
    rt = pl.program_id(0)
    b = pl.program_id(1)

    # Build the pe tile once per row-tile; every batch step (inner axis) reuses it.
    @pl.when(b == 0)
    def _():
        base = rt * rows_per_block
        row = (jax.lax.broadcasted_iota(jnp.int32, pe_ref.shape, 0) + base
               ).astype(jnp.float32)
        angle = row * const_ref[0:1, :] + const_ref[1:2, :]
        pe_ref[...] = jnp.sin(angle).astype(pe_ref.dtype)

    # Pure streaming add in the native dtype (HBM-bandwidth bound).
    o_ref[...] = x_ref[...] + pe_ref[...]


def positional_encoding_forward(x: jnp.ndarray, max_len: int = 5000,
                                donate_x: bool = False) -> jnp.ndarray:
    """x: (B, S, D). Returns x + pe[:, :S, :] with pe as in the PyTorch module."""
    B, S, D = x.shape
    assert D % 2 == 0, "d_model must be even (as required by the torch module)"
    assert S <= max_len, "sequence length exceeds max_len"

    # Layout plumbing (contiguous reshape, no data movement): fold TS consecutive
    # positions into one lane-dense row so stores are unmasked full-lane vst.
    TS = _fold_factor(S, D)
    LW = TS * D
    R = S // TS
    target_bytes, vmem_limit = _vmem_budget()
    TR = _row_tile(R, LW, jnp.dtype(x.dtype).itemsize, target_bytes)
    n_rt = pl.cdiv(R, TR)
    x3 = x.reshape(B, R, LW)
    const = _pe_constants(D, TS)

    kernel = functools.partial(_pe_add_kernel, rows_per_block=TR)

    # NOTE: if LW ever exceeds ~512K lanes, also tile the lane axis (x128 blocks).
    out = pl.pallas_call(
        kernel,
        out_shape=jax.ShapeDtypeStruct((B, R, LW), x.dtype),
        grid_spec=pltpu.PrefetchScalarGridSpec(
            num_scalar_prefetch=0,
            grid=(n_rt, B),                        # row-tiles outer, batch inner
            in_specs=[
                # x tile: leading batch dim squeezed -> kernel ref is (TR, LW)
                pl.BlockSpec((None, TR, LW), lambda rt, b: (b, rt, 0)),
                # tiny per-lane constants: same block every step
                pl.BlockSpec((2, LW), lambda rt, b: (0, 0)),
            ],
            out_specs=pl.BlockSpec((None, TR, LW), lambda rt, b: (b, rt, 0)),
            scratch_shapes=[pltpu.VMEM((TR, LW), x.dtype)],   # cached pe tile
        ),
        compiler_params=pltpu.CompilerParams(
            # Long row-tile axis is independent -> v7x megacore splits it evenly.
            # Batch axis must stay serial so the cached pe scratch is valid.
            dimension_semantics=("parallel", "arbitrary"),
            vmem_limit_bytes=vmem_limit,
        ),
        input_output_aliases={0: 0} if donate_x else {},
    )(x3, const)

    return out.reshape(B, S, D)


if __name__ == "__main__":
    # Small shapes consistent with the module's forward: (batch, seq, d_model)
    B, S, D = 2, 8, 32
    max_len = 5000

    key = jax.random.PRNGKey(0)
    x = jax.random.normal(key, (B, S, D), dtype=jnp.float32)

    out = positional_encoding_forward(x, max_len=max_len)
    out = jax.block_until_ready(out)

    # Reference check against the buffer built exactly like the torch __init__.
    pe = build_pe(D, max_len=max_len)
    ref = x + pe[:, :S, :]
    assert out.shape == (B, S, D)
    # TPU sin range-reduction can differ from the host f32 reference by ~1e-4 at
    # large arguments; use a tolerance that stays robust for long sequences too.
    assert jnp.allclose(out, ref, atol=1e-4, rtol=1e-4), float(jnp.max(jnp.abs(out - ref)))

    print("KERNEL_OK")
</pallas_src>

<mosaic_0001>
module attributes {stable_mosaic.version = 11 : i64} {
  func.func @_pe_add_kernel(%arg0: i32, %arg1: i32, %arg2: memref<1x2x128xf32, #tpu.memory_space<vmem>>, %arg3: memref<2x128xf32, #tpu.memory_space<vmem>>, %arg4: memref<1x2x128xf32, #tpu.memory_space<vmem>>, %arg5: memref<2x128xf32, #tpu.memory_space<vmem>>) attributes {dimension_semantics = [#tpu.dimension_semantics<parallel>, #tpu.dimension_semantics<arbitrary>], iteration_bounds = array<i64: 1, 2>, scalar_prefetch = 0 : i64, scratch_operands = 1 : i64, tpu.core_type = #tpu.core_type<tc>, window_params = [{transform_indices = @transform_0, window_bounds = array<i64: 1, 2, 128>}, {pipeline_mode = #tpu.pipeline_mode<synchronous>, transform_indices = @transform_1, window_bounds = array<i64: 2, 128>}, {transform_indices = @transform_2, window_bounds = array<i64: 1, 2, 128>}]} {
    %c0_i32 = arith.constant 0 : i32
    %0 = arith.cmpi eq, %arg1, %c0_i32 : i32
    %1 = arith.extui %0 : i1 to i32
    %c0_i32_0 = arith.constant 0 : i32
    %2 = arith.cmpi ne, %1, %c0_i32_0 : i32
    scf.if %2 {
      %c2_i32 = arith.constant 2 : i32
      %10 = arith.muli %arg0, %c2_i32 : i32
      %11 = tpu.iota {dimensions = array<i32: 0>} : vector<2x128xi32>
      %12 = vector.broadcast %10 : i32 to vector<2x128xi32>
      %13 = arith.addi %11, %12 : vector<2x128xi32>
      %14 = arith.sitofp %13 : vector<2x128xi32> to vector<2x128xf32>
      %c0_8 = arith.constant 0 : index
      %c0_9 = arith.constant 0 : index
      %15 = vector.load %arg3[%c0_8, %c0_9] : memref<2x128xf32, #tpu.memory_space<vmem>>, vector<1x128xf32>
      %16 = vector.broadcast %15 : vector<1x128xf32> to vector<2x128xf32>
      %17 = arith.mulf %14, %16 : vector<2x128xf32>
      %c1 = arith.constant 1 : index
      %c0_10 = arith.constant 0 : index
      %18 = vector.load %arg3[%c1, %c0_10] : memref<2x128xf32, #tpu.memory_space<vmem>>, vector<1x128xf32>
      %19 = vector.broadcast %18 : vector<1x128xf32> to vector<2x128xf32>
      %20 = arith.addf %17, %19 : vector<2x128xf32>
      %21 = math.sin %20 : vector<2x128xf32>
      %c0_11 = arith.constant 0 : index
      %c0_12 = arith.constant 0 : index
      %22 = vector.load %arg5[%c0_11, %c0_12] : memref<2x128xf32, #tpu.memory_space<vmem>>, vector<2x128xf32>
      tpu.vector_store %arg5[%c0_11, %c0_12], %21 {strides = array<i32>} : memref<2x128xf32, #tpu.memory_space<vmem>>, vector<2x128xf32>,
    } else {
    }
    %c0 = arith.constant 0 : index
    %c0_1 = arith.constant 0 : index
    %c0_2 = arith.constant 0 : index
    %3 = vector.load %arg2[%c0, %c0_1, %c0_2] : memref<1x2x128xf32, #tpu.memory_space<vmem>>, vector<1x2x128xf32>
    %4 = vector.shape_cast %3 : vector<1x2x128xf32> to vector<2x128xf32>
    %c0_3 = arith.constant 0 : index
    %c0_4 = arith.constant 0 : index
    %5 = vector.load %arg5[%c0_3, %c0_4] : memref<2x128xf32, #tpu.memory_space<vmem>>, vector<2x128xf32>
    %6 = arith.addf %4, %5 : vector<2x128xf32>
    %c0_5 = arith.constant 0 : index
    %c0_6 = arith.constant 0 : index
    %c0_7 = arith.constant 0 : index
    %7 = vector.load %arg4[%c0_5, %c0_6, %c0_7] : memref<1x2x128xf32, #tpu.memory_space<vmem>>, vector<1x2x128xf32>
    %8 = vector.shape_cast %7 : vector<1x2x128xf32> to vector<2x128xf32>
    %9 = vector.shape_cast %6 : vector<2x128xf32> to vector<1x2x128xf32>
    tpu.vector_store %arg4[%c0_5, %c0_6, %c0_7], %9 {strides = array<i32>} : memref<1x2x128xf32, #tpu.memory_space<vmem>>, vector<1x2x128xf32>,
    return
  }
  func.func @transform_0(%arg0: i32, %arg1: i32) -> (i32, i32, i32) {
    %c0_i32 = arith.constant 0 : i32
    %c0_i32_0 = arith.constant 0 : i32
    return %arg1, %arg0, %c0_i32 : i32, i32, i32
  }
  func.func @transform_1(%arg0: i32, %arg1: i32) -> (i32, i32) {
    %c0_i32 = arith.constant 0 : i32
    %c0_i32_0 = arith.constant 0 : i32
    %c0_i32_1 = arith.constant 0 : i32
    return %c0_i32, %c0_i32_0 : i32, i32
  }
  func.func @transform_2(%arg0: i32, %arg1: i32) -> (i32, i32, i32) {
    %c0_i32 = arith.constant 0 : i32
    %c0_i32_0 = arith.constant 0 : i32
    return %arg1, %arg0, %c0_i32 : i32, i32, i32
  }
}

</mosaic_0001>

<llo_original>
// kernel: tpu_custom_call.1
$region0: #{tpu_custom_call.1}
  #allocation0 [shape = 'u32[]', space=smem, size = 0x4, offset = 0x4, fixed_abs, tag = 'smem constant byte address 0x4 - core index']
  #allocation1 [shape = 'u32[72,128]{1,0:T(1,128)}', space=vmem, size = 0x9000, scoped, tag = 'internal scratch']
  #allocation2 [shape = 'f32[2,128]{1,0:T(2,128)}', space=vmem, size = 0x400, scoped, tag = 'scratch operand']
  %s0 = inlined_call_operand.hbm [shape: f32[2,2,128], index: 0, kind: input, shape index: {}]
  %s1 = inlined_call_operand.hbm [shape: f32[2,128], index: 1, kind: input, shape index: {}]
  %s2 = inlined_call_operand.hbm [shape: f32[2,2,128], index: 2, kind: output, shape index: {}]
  %s3 = sld [smem:[#allocation0]]
  $region53: #{tpu_custom_call.1} parent=0
    _
  %s5 = ssub.s32 1, %s3
  %s6 = scalar_select 0, %s5, %s3
  $region1: #{tpu_custom_call.1} parent=0
    #allocation3 [shape = 'u8[2048]{0}', space=vmem, size = 0x800, scoped, tag = 'input window, operand 0']
    #allocation4 [shape = 's32[2]{0}', space=sflag, size = 0x8, scoped, tag = 'scoped memory for tpu_custom_call.1']
    #allocation5 [shape = 's32[2]{0}', space=sflag, size = 0x8, scoped, tag = 'scoped memory for tpu_custom_call.1']
    #allocation6 [shape = 'u8[1024]{0}', space=vmem, size = 0x400, scoped, tag = 'input window, operand 1, single buffered']
    #allocation7 [shape = 's32[1]{0}', space=sflag, size = 0x4, scoped, tag = 'scoped memory for tpu_custom_call.1']
    #allocation8 [shape = 'u8[2048]{0}', space=vmem, size = 0x800, scoped, tag = 'output window, operand 0']
    %7 = vsyncpa [#allocation4], 0
    %s8 = scalar_lea.sflag [#allocation4], 1
    %9 = vsyncpa %s8, 0
    %10 = vsyncpa [#allocation7], 0
    %11 = vsyncpa [#allocation5], 0
    %s12 = scalar_lea.sflag [#allocation5], 1
    %13 = vsyncpa %s12, 0
    loop: start=0, step=1, limit=4
    $region2: #{tpu_custom_call.1} parent=1 // loop_pre_header
      _
    $region3: #{tpu_custom_call.1} parent=1 // loop_header
      %s15 = sphi 0, %s19
      %p16 = scmp.ge.s32.totalorder %s15, 4
      %s22 = sphi 0, %s34
      %s23 = sphi 0, %s30
      %s24 = sphi 0, %s22
      %s25 = sphi 0, %s23
      %s26 = sphi 0, %s24
      %s27 = sphi 0, %s25
      %s39 = sphi 0, %s41
      %s42 = sphi 0, %s39
      %s43 = sphi 0, %s42
      %s59 = sphi 0, %s43
      %s63 = sphi 0, %s63
      %s65 = sphi 0, %s63
      %s66 = sphi 0, %s65
      %s80 = sphi 0, %s66
      %s88 = sphi 0, %s90
      %s91 = sphi 0, %s88
      %s92 = sphi 0, %s91
      %s108 = sphi 0, %s92
    $region4: #{tpu_custom_call.1} parent=1 // loop_header_branch
      %18 = sbr.rel (%p16) target = $region8
    $region5: #{tpu_custom_call.1} parent=1 // loop_body
      %s20 = ssub.s32 %s15, 1
      %s21 = ssub.s32 %s15, 2
      %s28 = sadd.s32 1, %s23
      %p29 = scmp.ge.s32.totalorder %s28, 2
      %s30 = scalar_select %p29, 0, %s28
      %s31 = sadd.s32 1, %s22
      %s32 = scalar_select %p29, %s31, %s22
      %p33 = scmp.ge.s32.totalorder %s32, 1
      %s34 = scalar_select %p33, 0, %s32
      %s35 = ssub.s32 %s23, %s30
      %s36 = ssub.s32 %s22, %s34
      %s37 = sor.u32 %s35, %s36
      %p38 = scmp.eq.s32.totalorder %s37, 0
      %s40 = sadd.s32 %s39, 1
      %s41 = scalar_select %p38, %s39, %s40
      %p44 = pneg %p38
      %p45 = scmp.eq.s32.totalorder %s15, 1
      %p46 = por %p44, %p45
      %p47 = scmp.ne.s32.totalorder %s39, %s42
      %p48 = scmp.eq.s32.totalorder %s15, 0
      %p49 = por %p47, %p48
      %p50 = scmp.ne.s32.totalorder %s39, %s42
      %p51 = scmp.eq.s32.totalorder %s20, 1
      %p52 = por %p50, %p51
      %p53 = scmp.ne.s32.totalorder %s42, %s43
      %p54 = scmp.eq.s32.totalorder %s20, 0
      %p55 = por %p53, %p54
      %p56 = scmp.ne.s32.totalorder %s42, %s43
      %p57 = scmp.eq.s32.totalorder %s21, 1
      %p58 = por %p56, %p57
      %p60 = scmp.ne.s32.totalorder %s43, %s59
      %p61 = scmp.eq.s32.totalorder %s21, 0
      %p62 = por %p60, %p61
      %s64 = sadd.s32 %s63, 1
      %p67 = scmp.eq.s32.totalorder %s15, 1
      %p68 = scmp.ne.s32.totalorder %s63, %s65
      %p69 = scmp.eq.s32.totalorder %s15, 0
      %p70 = por %p68, %p69
      %p71 = scmp.ne.s32.totalorder %s63, %s65
      %p72 = scmp.eq.s32.totalorder %s20, 1
      %p73 = por %p71, %p72
      %p74 = scmp.ne.s32.totalorder %s65, %s66
      %p75 = scmp.eq.s32.totalorder %s20, 0
      %p76 = por %p74, %p75
      %p77 = scmp.ne.s32.totalorder %s65, %s66
      %p78 = scmp.eq.s32.totalorder %s21, 1
      %p79 = por %p77, %p78
      %p81 = scmp.ne.s32.totalorder %s66, %s80
      %p82 = scmp.eq.s32.totalorder %s21, 0
      %p83 = por %p81, %p82
      %s84 = ssub.s32 %s23, %s30
      %s85 = ssub.s32 %s22, %s34
      %s86 = sor.u32 %s84, %s85
      %p87 = scmp.eq.s32.totalorder %s86, 0
      %s89 = sadd.s32 %s88, 1
      %s90 = scalar_select %p87, %s88, %s89
      %p93 = pneg %p87
      %p94 = scmp.eq.s32.totalorder %s15, 1
      %p95 = por %p93, %p94
      %p96 = scmp.ne.s32.totalorder %s88, %s91
      %p97 = scmp.eq.s32.totalorder %s15, 0
      %p98 = por %p96, %p97
      %p99 = scmp.ne.s32.totalorder %s88, %s91
      %p100 = scmp.eq.s32.totalorder %s20, 1
      %p101 = por %p99, %p100
      %p102 = scmp.ne.s32.totalorder %s91, %s92
      %p103 = scmp.eq.s32.totalorder %s20, 0
      %p104 = por %p102, %p103
      %p105 = scmp.ne.s32.totalorder %s91, %s92
      %p106 = scmp.eq.s32.totalorder %s21, 1
      %p107 = por %p105, %p106
      %p109 = scmp.ne.s32.totalorder %s92, %s108
      %p110 = scmp.eq.s32.totalorder %s21, 0
      %p111 = por %p109, %p110
      %p112 = scmp.le.s32.totalorder 1, %s15
      %p113 = scmp.lt.s32.totalorder %s15, 3
      %p114 = pnand %p112, %p113
      %p115 = pneg %p114
      // Predicated region
      $region9: #{tpu_custom_call.1} parent=5 // pred_check
        _
      $region10: #{tpu_custom_call.1} parent=5 // pred_check_branch
        %117 = sbr.rel (%p114) target = $region12
      $region11: #{tpu_custom_call.1} parent=5 // pred_region
        %s118 = ssub.s32 %s15, 1
        // Predicated region
        $region13: #{tpu_custom_call.1} parent=11 // pred_check
          %p119 = pneg %p76
        $region14: #{tpu_custom_call.1} parent=11 // pred_check_branch
          %121 = sbr.rel (%p119) target = $region16
        $region15: #{tpu_custom_call.1} parent=11 // pred_region
          %123 = vsyncadd [#allocation7], 0
          %s125 = sshll.u32 %s1, 4
          %s126 = int_to_ptr.hbm [resolvable:$true] %s125
          %s127 = sshll.u32 [#allocation6], 4
          %s128 = int_to_ptr.vmem [resolvable:$true] %s127
          %130 = dma.hbm_to_vmem [thread:$0]  %s126, 32, %s128, [#allocation7]
        $region16: #{tpu_custom_call.1} parent=11 // pred_fallthru
          _
      $region12: #{tpu_custom_call.1} parent=5 // pred_fallthru
        _
      %p131 = scmp.lt.s32.totalorder %s15, 2
      // Predicated region
      $region17: #{tpu_custom_call.1} parent=5 // pred_check
        %p132 = pneg %p131
      $region18: #{tpu_custom_call.1} parent=5 // pred_check_branch
        %134 = sbr.rel (%p132) target = $region20
      $region19: #{tpu_custom_call.1} parent=5 // pred_region
        // Predicated region
        $region21: #{tpu_custom_call.1} parent=19 // pred_check
          %p135 = pneg %p49
        $region22: #{tpu_custom_call.1} parent=19 // pred_check_branch
          %137 = sbr.rel (%p135) target = $region24
        $region23: #{tpu_custom_call.1} parent=19 // pred_region
          %s138 = sand.u32 %s39, 1
          %s139 = scalar_lea.sflag [#allocation4], %s138
          %s140 = sand.u32 %s39, 1
          %s141 = smul.addr %s140, 2
          %s142 = scalar_lea.vmem [#allocation3], %s141
          %144 = vsyncadd %s139, 0
          %s145 = sadd.s32 %s22, %s23
          %s146 = smul.addr %s145, 2
          %s147 = scalar_lea.hbm %s0, %s146
          %s149 = sshll.u32 %s147, 4
          %s150 = int_to_ptr.hbm [resolvable:$true] %s149
          %s151 = sshll.u32 %s142, 4
          %s152 = int_to_ptr.vmem [resolvable:$true] %s151
          %154 = dma.hbm_to_vmem [thread:$0]  %s150, 32, %s152, %s139
        $region24: #{tpu_custom_call.1} parent=19 // pred_fallthru
          _
      $region20: #{tpu_custom_call.1} parent=5 // pred_fallthru
        _
      %p155 = scmp.le.s32.totalorder 1, %s15
      %p156 = scmp.lt.s32.totalorder %s15, 3
      %p157 = pnand %p155, %p156
      %p158 = pneg %p157
      // Predicated region
      $region25: #{tpu_custom_call.1} parent=5 // pred_check
        _
      $region26: #{tpu_custom_call.1} parent=5 // pred_check_branch
        %160 = sbr.rel (%p157) target = $region28
      $region27: #{tpu_custom_call.1} parent=5 // pred_region
        %s161 = ssub.s32 %s15, 1
        %s162 = sand.u32 %s42, 1
        %s163 = scalar_lea.sflag [#allocation4], %s162
        %s164 = sand.u32 %s42, 1
        %s165 = smul.addr %s164, 2
        %s166 = scalar_lea.vmem [#allocation3], %s165
        // Predicated region
        $region29: #{tpu_custom_call.1} parent=27 // pred_check
          %p167 = pneg %p55
        $region30: #{tpu_custom_call.1} parent=27 // pred_check_branch
          %169 = sbr.rel (%p167) target = $region32
        $region31: #{tpu_custom_call.1} parent=27 // pred_region
          %171 = dma.done %s163, 32
        $region32: #{tpu_custom_call.1} parent=27 // pred_fallthru
          _
        // Predicated region
        $region33: #{tpu_custom_call.1} parent=27 // pred_check
          %p172 = pneg %p76
        $region34: #{tpu_custom_call.1} parent=27 // pred_check_branch
          %174 = sbr.rel (%p172) target = $region36
        $region35: #{tpu_custom_call.1} parent=27 // pred_region
          %176 = dma.done [#allocation7], 32
        $region36: #{tpu_custom_call.1} parent=27 // pred_fallthru
          _
        %s177 = sand.u32 %s42, 1
        %s178 = scalar_lea.sflag [#allocation4], %s177
        %s179 = sand.u32 %s42, 1
        %s180 = smul.addr %s179, 2
        %s181 = scalar_lea.vmem [#allocation3], %s180
        %p182 = pneg %p55
        %p183 = pneg %p52
        %p184 = pneg %p76
        %p185 = pneg %p73
        %p186 = pneg %p104
        %p187 = pneg %p101
        %s188 = sand.u32 %s91, 1
        %s189 = scalar_lea.sflag [#allocation5], %s188
        %s190 = sand.u32 %s91, 1
        %s191 = smul.addr %s190, 2
        %s192 = scalar_lea.vmem [#allocation8], %s191
        %p193 = scmp.eq.s32.totalorder %s25, 0
        // Predicated region
        $region37: #{tpu_custom_call.1} parent=27 // pred_check
          %p194 = pneg %p193
        $region38: #{tpu_custom_call.1} parent=27 // pred_check_branch
          %196 = sbr.rel (%p194) target = $region40
        $region39: #{tpu_custom_call.1} parent=27 // pred_region
          %s197 = smul.u32 %s24, 2
          %v198 = vlaneseq
          %v199 = vshrl.u32 %v198, 7
          %v200 = vstv %s197
          %v201 = vadd.s32 %v199, %v200
          %v202 = vcvt.s32.f32 %v201
          %v203 = vld [vmem:[#allocation6] sm:$0x1]
          %v204 = vperm.slane %v203, 0
          %v205 = vmul.f32 %v202, %v204
          %v206 = vld [vmem:[#allocation6 + $0x1] sm:$0x1]
          %v207 = vperm.slane %v206, 0
          %v208 = vadd.f32 %v205, %v207
          %v209 = vand.u32 2147483647, %v208
          %vm210 = vcmp.le.f32.partialorder %v209, 0.7853982
          %vm211 = vcmp.lt.s32.totalorder %v208, 0
          %v212 = vand.u32 %v208, 2139095040
          %v213 = vshrl.u32 %v212, 23
          %v214 = vsub.s32 %v213, 127
          %v215 = vand.u32 2147483647, %v208
          %v216 = vand.u32 %v215, 8388607
          %v217 = vor.u32 %v216, 8388608
          %v218 = vsub.s32 0, %v217
          %v219 = vadd.s32 %v214, 1
          %vm220 = vcmp.gt.s32.totalorder %v219, 0
          %v221 = vsel %vm220, %v219, 0
          %v222 = vshrl.u32 %v221, 5
          %v223 = vand.u32 %v221, 31
          %v224 = vsub.s32 32, %v223
          %v225 = vshrl.u32 683565275, %v224
          %v226 = vshll.u32 683565275, %v223
          %v227 = vshrl.u32 2475754826, %v224
          %v228 = vor.u32 %v226, %v227
          %v229 = vshll.u32 2475754826, %v223
          %v230 = vshrl.u32 2131351028, %v224
          %v231 = vor.u32 %v229, %v230
          %v232 = vshll.u32 2131351028, %v223
          %v233 = vshrl.u32 2102212464, %v224
          %v234 = vor.u32 %v232, %v233
          %v235 = vshll.u32 2102212464, %v223
          %v236 = vshrl.u32 920167782, %v224
          %v237 = vor.u32 %v235, %v236
          %v238 = vshll.u32 920167782, %v223
          %v239 = vshrl.u32 1326507024, %v224
          %v240 = vor.u32 %v238, %v239
          %vm241 = vcmp.lt.s32.totalorder %v222, 1
          %vm242 = vcmp.lt.s32.totalorder %v222, 2
          %vm243 = vcmp.lt.s32.totalorder %v222, 3
          %vm244 = vcmp.lt.s32.totalorder %v222, 4
          %v245 = vsel %vm241, %v225, %v228
          %v246 = vsel %vm244, %v234, 2102212464
          %v247 = vsel %vm243, %v231, %v246
          %v248 = vsel %vm242, %v245, %v247
          %v249 = vsel %vm241, %v228, %v231
          %v250 = vsel %vm244, %v237, 920167782
          %v251 = vsel %vm243, %v234, %v250
          %v252 = vsel %vm242, %v249, %v251
          %v253 = vsel %vm241, %v231, %v234
          %v254 = vsel %vm244, %v240, 1326507024
          %v255 = vsel %vm243, %v237, %v254
          %v256 = vsel %vm242, %v253, %v255
          %v257 = vshll.u32 %v217, 8
          %v258 = vand.u32 %v257, 65535
          %v259 = vshrl.u32 %v257, 16
          %v260 = vand.u32 %v256, 65535
          %v261 = vshrl.u32 %v256, 16
          %v262 = vmul.u32 %v258, %v260
          %v263 = vmul.u32 %v258, %v261
          %v264 = vmul.u32 %v259, %v260
          %v265 = vmul.u32 %v259, %v261
          %v266 = vshll.u32 %v263, 16
          %v267 = vshrl.u32 %v263, 16
          %v268 = vshll.u32 %v264, 16
          %v269 = vshrl.u32 %v264, 16
          %vm270 = vc.u32 %v262, %v266
          %v271 = vsel %vm270, 1, 0
          %v272 = vadd.s32 %v262, %v266
          %v273 = vadd.s32 %v265, %v271
          %vm274 = vc.u32 %v272, %v268
          %v275 = vsel %vm274, 1, 0
          %v276 = vadd.s32 %v272, %v268
          %v277 = vadd.s32 %v273, %v275
          %v278 = vadd.s32 %v277, %v267
          %v279 = vadd.s32 %v278, %v269
          %v280 = vand.u32 %v257, 65535
          %v281 = vshrl.u32 %v257, 16
          %v282 = vand.u32 %v252, 65535
          %v283 = vshrl.u32 %v252, 16
          %v284 = vmul.u32 %v280, %v282
          %v285 = vmul.u32 %v280, %v283
          %v286 = vmul.u32 %v281, %v282
          %v287 = vmul.u32 %v281, %v283
          %v288 = vshll.u32 %v285, 16
          %v289 = vshrl.u32 %v285, 16
          %v290 = vshll.u32 %v286, 16
          %v291 = vshrl.u32 %v286, 16
          %vm292 = vc.u32 %v284, %v288
          %v293 = vsel %vm292, 1, 0
          %v294 = vadd.s32 %v284, %v288
          %v295 = vadd.s32 %v287, %v293
          %vm296 = vc.u32 %v294, %v290
          %v297 = vsel %vm296, 1, 0
          %v298 = vadd.s32 %v294, %v290
          %v299 = vadd.s32 %v295, %v297
          %v300 = vadd.s32 %v299, %v289
          %v301 = vadd.s32 %v300, %v291
          %v302 = vmul.u32 %v257, %v248
          %v303 = vadd.s32 %v279, %v298
          %vm304 = vc.u32 %v279, %v298
          %v305 = vadd.s32 %v301, 1
          %v306 = vsel %vm304, %v305, %v301
          %v307 = vadd.s32 %v302, %v306
          %v308 = vadd.s32 %v307, 536870912
          %v309 = vshrl.u32 %v308, 30
          %v310 = vshll.u32 %v309, 30
          %v311 = vsub.s32 %v307, %v310
          %vm312 = vcmp.lt.s32.totalorder %v311, 0
          %v313 = vsub.s32 0, %v311
          %v314 = vsel %vm312, %v313, %v311
          %v315 = vclz %v314
          %v316 = vsub.s32 %v315, 2
          %vm317 = vcmp.gt.s32.totalorder 0, %v316
          %v318 = vsel %vm317, 0, %v316
          %v319 = vsub.s32 32, %v318
          %v320 = vshll.u32 %v311, %v318
          %v321 = vshrl.u32 %v303, %v319
          %v322 = vor.u32 %v320, %v321
          %v323 = vsub.s32 4294967266, %v318
          %v324 = vadd.s32 %v323, 127
          %v325 = vshll.u32 %v324, 23
          %v326 = vor.u32 4788187, %v325
          %v327 = vand.u32 2147483647, %v326
          %v329 = vcvt.s32.f32 %v322
          %v330 = vmul.f32 %v329, %v327
          %v331 = vxor.u32 %v330, 2147483648
          %v332 = vsel %vm211, %v331, %v330
          %v333 = vsub.s32 4, %v309
          %v334 = vsel %vm211, %v333, %v309
          %v335 = vsel %vm210, %v208, %v332
          %v336 = vsel %vm210, 0, %v334
          %v337 = vmul.f32 %v335, %v335
          %v338 = vmul.f32 %v337, -0.001358992
          %v339 = vadd.f32 %v338, 0.041655596
          %v340 = vmul.f32 %v337, %v339
          %v341 = vadd.f32 %v340, -0.4999988
          %v342 = vmul.f32 %v337, %v341
          %v343 = vadd.f32 1.0, %v342
          %v344 = vmul.f32 %v335, %v335
          %v345 = vmul.f32 %v344, -0.00019511016
          %v346 = vadd.f32 %v345, 0.008332121
          %v347 = vmul.f32 %v344, %v346
          %v348 = vadd.f32 %v347, -0.16666654
          %v349 = vmul.f32 %v344, %v348
          %v350 = vadd.f32 %v349, 1.0
          %v351 = vmul.f32 %v350, %v335
          %vm352 = vweird.f32 %v208
          %v353 = vadd.s32 %v336, 3
          %v354 = vand.u32 %v353, 3
          %vm355 = vcmp.lt.s32.totalorder %v354, 2
          %vm356 = vcmp.eq.s32.totalorder %v354, 0
          %v357 = vxor.u32 %v351, 2147483648
          %v358 = vsel %vm356, %v343, %v357
          %vm359 = vcmp.eq.s32.totalorder %v354, 2
          %v360 = vxor.u32 %v343, 2147483648
          %v361 = vsel %vm359, %v360, %v351
          %v362 = vsel %vm355, %v358, %v361
          %v363 = vsel %vm352, nan, %v362
          %364 = vst [vmem:[#allocation2] sm:$0x3] %v363
        $region40: #{tpu_custom_call.1} parent=27 // pred_fallthru
          _
        %v365 = vld [vmem:[%s166] sm:$0x3]
        %v366 = vld [vmem:[#allocation2] sm:$0x3]
        %v367 = vadd.f32 %v365, %v366
        %368 = vst [vmem:[%s192] sm:$0x3] %v367
        %s369 = sand.u32 %s91, 1
        %s370 = scalar_lea.sflag [#allocation5], %s369
        %s371 = sand.u32 %s91, 1
        %s372 = smul.addr %s371, 2
        %s373 = scalar_lea.vmem [#allocation8], %s372
        // Predicated region
        $region41: #{tpu_custom_call.1} parent=27 // pred_check
          %p374 = pneg %p101
        $region42: #{tpu_custom_call.1} parent=27 // pred_check_branch
          %376 = sbr.rel (%p374) target = $region44
        $region43: #{tpu_custom_call.1} parent=27 // pred_region
          %378 = vsyncadd %s370, 0
          %s379 = sadd.s32 %s24, %s25
          %s380 = smul.addr %s379, 2
          %s381 = scalar_lea.hbm %s2, %s380
          %s383 = sshll.u32 %s373, 4
          %s384 = int_to_ptr.vmem [resolvable:$true] %s383
          %s385 = sshll.u32 %s381, 4
          %s386 = int_to_ptr.hbm [resolvable:$true] %s385
          %388 = dma.vmem_to_hbm [thread:$0]  %s384, 32, %s386, %s370
        $region44: #{tpu_custom_call.1} parent=27 // pred_fallthru
          _
      $region28: #{tpu_custom_call.1} parent=5 // pred_fallthru
        _
      %p389 = scmp.le.s32.totalorder 2, %s15
      // Predicated region
      $region45: #{tpu_custom_call.1} parent=5 // pred_check
        %p390 = pneg %p389
      $region46: #{tpu_custom_call.1} parent=5 // pred_check_branch
        %392 = sbr.rel (%p390) target = $region48
      $region47: #{tpu_custom_call.1} parent=5 // pred_region
        %s393 = ssub.s32 %s15, 2
        // Predicated region
        $region49: #{tpu_custom_call.1} parent=47 // pred_check
          %p394 = pneg %p107
        $region50: #{tpu_custom_call.1} parent=47 // pred_check_branch
          %396 = sbr.rel (%p394) target = $region52
        $region51: #{tpu_custom_call.1} parent=47 // pred_region
          %s397 = sand.u32 %s92, 1
          %s398 = scalar_lea.sflag [#allocation5], %s397
          %s399 = sand.u32 %s92, 1
          %s400 = smul.addr %s399, 2
          %s401 = scalar_lea.vmem [#allocation8], %s400
          %403 = dma.done %s398, 32
        $region52: #{tpu_custom_call.1} parent=47 // pred_fallthru
          _
      $region48: #{tpu_custom_call.1} parent=5 // pred_fallthru
        _
    $region6: #{tpu_custom_call.1} parent=1 // loop_footer
      %s19 = sadd.s32 1, %s15
    $region7: #{tpu_custom_call.1} parent=1 // loop_footer_branch
      %14 = sbr.rel target = $region3
    $region8: #{tpu_custom_call.1} parent=1 // loop_exit
      _
    %404 = vsyncpa [#allocation4], 1
    %s405 = scalar_lea.sflag [#allocation4], 1
    %406 = vsyncpa %s405, 1
    %407 = vsyncpa [#allocation7], 1
    %408 = vsyncpa [#allocation5], 1
    %s409 = scalar_lea.sflag [#allocation5], 1
    %410 = vsyncpa %s409, 1

</llo_original>
